<compile_context>
chip_gen: v5e
topology: v5e:2x2
jax: 0.10.0
libtpu: 0.0.40
codegen_flags: <defaults>
</compile_context>

<pallas_src>
import functools

import jax
import jax.numpy as jnp
from jax import lax
from jax.experimental import pallas as pl
from jax.experimental.pallas import tpu as pltpu


def _lane_shift(x, s):
    """result[:, i] = x[:, (i + s) % n].

    Wrapped entries are only ever *selected* at boundary positions that the
    caller overrides, so the wrap value is irrelevant.  Implemented as a concat
    of two static lane slices (Mosaic lowers this to a lane rotate/select).
    """
    return jnp.concatenate([x[:, s:], x[:, :s]], axis=1)


def _residual_block_kernel(x_ref, w1_ref, w2_ref, o_ref, *, B, C, H, W):
    eps = 1e-5
    HW = H * W
    inv_hw = 1.0 / float(HW)

    # Lane-coordinate boundary masks (hoisted; shared by both convs and all
    # images in this batch block).
    lane = lax.broadcasted_iota(jnp.int32, (C, HW), 1)
    if (W & (W - 1)) == 0:                      # power-of-two fast path
        w_idx = lane & (W - 1)
        h_idx = lane >> (W.bit_length() - 1)
    else:
        w_idx = lane % W
        h_idx = lane // W
    is_w_first = w_idx == 0
    is_w_last = w_idx == W - 1
    is_h_first = h_idx == 0
    is_h_last = h_idx == H - 1

    def conv3x3(x_flat, w_r):
        # Reflected w-direction taps (dw = 0, 1, 2) on the flat layout.
        xp1 = _lane_shift(x_flat, 1)            # x[h, w+1]
        xm1 = _lane_shift(x_flat, -1)           # x[h, w-1]
        x_w = (
            jnp.where(is_w_first, xp1, xm1),    # dw = 0 : x[h, w-1], reflected
            x_flat,                             # dw = 1
            jnp.where(is_w_last, xm1, xp1),     # dw = 2 : x[h, w+1], reflected
        )
        # Reflected h-direction taps (dh = 0, 1, 2) for each dw variant.
        taps = [[None] * 3 for _ in range(3)]
        for j, xc in enumerate(x_w):
            up = _lane_shift(xc, -W)            # xc[h-1, w]
            dn = _lane_shift(xc, W)             # xc[h+1, w]
            taps[0][j] = jnp.where(is_h_first, dn, up)   # dh = 0, reflected
            taps[1][j] = xc                               # dh = 1
            taps[2][j] = jnp.where(is_h_last, up, dn)    # dh = 2, reflected
        # im2col patch matrix; row index = (dh*3 + dw)*C + c_in.
        patches = jnp.concatenate(
            [taps[dh][dw] for dh in range(3) for dw in range(3)], axis=0)
        # One MXU matmul per conv: (C, 9C) @ (9C, HW).
        return jnp.dot(w_r, patches, preferred_element_type=jnp.float32)

    def instance_norm(y):
        # Fused single-pass statistics: var = E[y^2] - mean^2.
        s1 = jnp.sum(y, axis=-1, keepdims=True)
        s2 = jnp.sum(y * y, axis=-1, keepdims=True)
        mean = s1 * inv_hw
        var = jnp.maximum(s2 * inv_hw - mean * mean, 0.0)
        return (y - mean) * lax.rsqrt(var + eps)

    w1 = w1_ref[...]
    w2 = w2_ref[...]
    for b in range(B):                          # static unroll over batch block
        x = x_ref[b].astype(jnp.float32)        # (C, HW), lane-dense
        y = jnp.maximum(instance_norm(conv3x3(x, w1)), 0.0)   # conv1 + IN + ReLU
        z = instance_norm(conv3x3(y, w2))                      # conv2 + IN
        o_ref[b] = (x + z).astype(o_ref.dtype)                 # residual add


def _pick_batch_block(N, C, HW):
    """Images per grid step: amortize the ~0.35us/step overhead, but keep >= 2
    parallel grid steps when the batch allows (v7x has 2 TensorCores) and bound
    the per-step VMEM footprint (v7x has 64 MiB)."""
    per_image_bytes = 24 * C * HW * 4           # x, 9 patches, temps, out (f32)
    budget = 8 * 1024 * 1024
    max_b = max(1, budget // per_image_bytes)
    limit = N // 2 if N >= 2 else N
    best = 1
    for b in range(1, max(limit, 1) + 1):
        if N % b == 0 and b <= max_b:
            best = b
    return best


def residual_block(x, w1, b1, w2, b2):
    """x: (N, C, H, W); w*: (C, C, 3, 3); b*: (C,).

    b1/b2 are accepted for parameter parity with the PyTorch module but are
    dropped: a per-channel bias before InstanceNorm2d(affine=False) is exactly
    cancelled by the mean subtraction.
    """
    del b1, b2
    N, C, H, W = x.shape
    HW = H * W

    # Repack conv weights to im2col form (C_out, 9*C_in), k = dh*3 + dw.
    def repack(w):
        return jnp.transpose(w, (0, 2, 3, 1)).reshape(C, 9 * C).astype(jnp.float32)

    w1r, w2r = repack(w1), repack(w2)
    x_flat = x.reshape(N, C, HW)                # lane-dense layout (free reshape)

    B = _pick_batch_block(N, C, HW)
    kernel = functools.partial(_residual_block_kernel, B=B, C=C, H=H, W=W)

    out_flat = pl.pallas_call(
        kernel,
        out_shape=jax.ShapeDtypeStruct((N, C, HW), x.dtype),
        grid_spec=pltpu.PrefetchScalarGridSpec(
            num_scalar_prefetch=0,
            grid=(N // B,),
            in_specs=[
                pl.BlockSpec((B, C, HW), lambda n: (n, 0, 0)),
                pl.BlockSpec((C, 9 * C), lambda n: (0, 0)),   # grid-invariant
                pl.BlockSpec((C, 9 * C), lambda n: (0, 0)),   # grid-invariant
            ],
            out_specs=pl.BlockSpec((B, C, HW), lambda n: (n, 0, 0)),
        ),
        compiler_params=pltpu.CompilerParams(
            dimension_semantics=("parallel",)),
    )(x_flat, w1r, w2r)
    return out_flat.reshape(N, C, H, W)


def residual_block_ref(x, w1, b1, w2, b2):
    """Pure-JAX reference matching the PyTorch module semantics."""
    eps = 1e-5

    def conv(y, w, b):
        yp = jnp.pad(y, ((0, 0), (0, 0), (1, 1), (1, 1)), mode="reflect")
        out = lax.conv_general_dilated(
            yp, w, window_strides=(1, 1), padding="VALID",
            dimension_numbers=("NCHW", "OIHW", "NCHW"))
        return out + b[None, :, None, None]

    def inorm(y):
        mean = jnp.mean(y, axis=(2, 3), keepdims=True)
        var = jnp.mean((y - mean) ** 2, axis=(2, 3), keepdims=True)
        return (y - mean) * lax.rsqrt(var + eps)

    h = jnp.maximum(inorm(conv(x, w1, b1)), 0.0)
    h = inorm(conv(h, w2, b2))
    return x + h


if __name__ == "__main__":
    N, C, H, W = 2, 4, 16, 16   # in_features = C = 4

    key = jax.random.PRNGKey(0)
    kx, kw1, kb1, kw2, kb2 = jax.random.split(key, 5)

    x = jax.random.normal(kx, (N, C, H, W), dtype=jnp.float32)
    # Deterministic synthetic parameters (Conv2d(C, C, 3) weight/bias shapes).
    w1 = 0.1 * jax.random.normal(kw1, (C, C, 3, 3), dtype=jnp.float32)
    b1 = 0.1 * jax.random.normal(kb1, (C,), dtype=jnp.float32)
    w2 = 0.1 * jax.random.normal(kw2, (C, C, 3, 3), dtype=jnp.float32)
    b2 = 0.1 * jax.random.normal(kb2, (C,), dtype=jnp.float32)

    out = jax.block_until_ready(residual_block(x, w1, b1, w2, b2))
    ref = jax.block_until_ready(residual_block_ref(x, w1, b1, w2, b2))

    assert out.shape == (N, C, H, W)
    max_err = float(jnp.max(jnp.abs(out - ref)))
    assert jnp.allclose(out, ref, atol=1e-3, rtol=1e-3), max_err

    print("KERNEL_OK")
</pallas_src>

<mosaic_0001>
module attributes {stable_mosaic.version = 11 : i64} {
  func.func @_residual_block_kernel(%arg0: i32, %arg1: memref<1x4x256xf32, #tpu.memory_space<vmem>>, %arg2: memref<4x36xf32, #tpu.memory_space<vmem>>, %arg3: memref<4x36xf32, #tpu.memory_space<vmem>>, %arg4: memref<1x4x256xf32, #tpu.memory_space<vmem>>) attributes {dimension_semantics = [#tpu.dimension_semantics<parallel>], iteration_bounds = array<i64: 2>, scalar_prefetch = 0 : i64, scratch_operands = 0 : i64, tpu.core_type = #tpu.core_type<tc>, window_params = [{transform_indices = @transform_0, window_bounds = array<i64: 1, 4, 256>}, {pipeline_mode = #tpu.pipeline_mode<synchronous>, transform_indices = @transform_1, window_bounds = array<i64: 4, 36>}, {pipeline_mode = #tpu.pipeline_mode<synchronous>, transform_indices = @transform_2, window_bounds = array<i64: 4, 36>}, {transform_indices = @transform_3, window_bounds = array<i64: 1, 4, 256>}]} {
    %0 = tpu.iota {dimensions = array<i32: 1>} : vector<4x256xi32>
    %c15_i32 = arith.constant 15 : i32
    %1 = vector.broadcast %c15_i32 : i32 to vector<4x256xi32>
    %2 = arith.andi %0, %1 : vector<4x256xi32>
    %c4_i32 = arith.constant 4 : i32
    %3 = vector.broadcast %c4_i32 : i32 to vector<4x256xi32>
    %4 = arith.shrsi %0, %3 : vector<4x256xi32>
    %c0_i32 = arith.constant 0 : i32
    %5 = vector.broadcast %c0_i32 : i32 to vector<4x256xi32>
    %6 = arith.cmpi eq, %2, %5 : vector<4x256xi32>
    %c15_i32_0 = arith.constant 15 : i32
    %7 = vector.broadcast %c15_i32_0 : i32 to vector<4x256xi32>
    %8 = arith.cmpi eq, %2, %7 : vector<4x256xi32>
    %c0_i32_1 = arith.constant 0 : i32
    %9 = vector.broadcast %c0_i32_1 : i32 to vector<4x256xi32>
    %10 = arith.cmpi eq, %4, %9 : vector<4x256xi32>
    %c15_i32_2 = arith.constant 15 : i32
    %11 = vector.broadcast %c15_i32_2 : i32 to vector<4x256xi32>
    %12 = arith.cmpi eq, %4, %11 : vector<4x256xi32>
    %c0 = arith.constant 0 : index
    %c0_3 = arith.constant 0 : index
    %13 = vector.load %arg2[%c0, %c0_3] : memref<4x36xf32, #tpu.memory_space<vmem>>, vector<4x36xf32>
    %c0_4 = arith.constant 0 : index
    %c0_5 = arith.constant 0 : index
    %14 = vector.load %arg3[%c0_4, %c0_5] : memref<4x36xf32, #tpu.memory_space<vmem>>, vector<4x36xf32>
    %c0_6 = arith.constant 0 : index
    %c0_7 = arith.constant 0 : index
    %c0_8 = arith.constant 0 : index
    %15 = vector.load %arg1[%c0_6, %c0_7, %c0_8] : memref<1x4x256xf32, #tpu.memory_space<vmem>>, vector<1x4x256xf32>
    %16 = vector.shape_cast %15 : vector<1x4x256xf32> to vector<4x256xf32>
    %17 = vector.extract_strided_slice %16 {offsets = [0, 1], sizes = [4, 255], strides = [1, 1]} : vector<4x256xf32> to vector<4x255xf32>
    %18 = vector.extract_strided_slice %16 {offsets = [0, 0], sizes = [4, 1], strides = [1, 1]} : vector<4x256xf32> to vector<4x1xf32>
    %19 = tpu.concatenate %17, %18 in 1 : vector<4x255xf32>, vector<4x1xf32> -> vector<4x256xf32>
    %20 = vector.extract_strided_slice %16 {offsets = [0, 255], sizes = [4, 1], strides = [1, 1]} : vector<4x256xf32> to vector<4x1xf32>
    %21 = vector.extract_strided_slice %16 {offsets = [0, 0], sizes = [4, 255], strides = [1, 1]} : vector<4x256xf32> to vector<4x255xf32>
    %22 = tpu.concatenate %20, %21 in 1 : vector<4x1xf32>, vector<4x255xf32> -> vector<4x256xf32>
    %23 = arith.select %6, %19, %22 : vector<4x256xi1>, vector<4x256xf32>
    %24 = arith.select %8, %22, %19 : vector<4x256xi1>, vector<4x256xf32>
    %25 = vector.extract_strided_slice %23 {offsets = [0, 240], sizes = [4, 16], strides = [1, 1]} : vector<4x256xf32> to vector<4x16xf32>
    %26 = vector.extract_strided_slice %23 {offsets = [0, 0], sizes = [4, 240], strides = [1, 1]} : vector<4x256xf32> to vector<4x240xf32>
    %27 = tpu.concatenate %25, %26 in 1 : vector<4x16xf32>, vector<4x240xf32> -> vector<4x256xf32>
    %28 = vector.extract_strided_slice %23 {offsets = [0, 16], sizes = [4, 240], strides = [1, 1]} : vector<4x256xf32> to vector<4x240xf32>
    %29 = vector.extract_strided_slice %23 {offsets = [0, 0], sizes = [4, 16], strides = [1, 1]} : vector<4x256xf32> to vector<4x16xf32>
    %30 = tpu.concatenate %28, %29 in 1 : vector<4x240xf32>, vector<4x16xf32> -> vector<4x256xf32>
    %31 = arith.select %10, %30, %27 : vector<4x256xi1>, vector<4x256xf32>
    %32 = arith.select %12, %27, %30 : vector<4x256xi1>, vector<4x256xf32>
    %33 = vector.extract_strided_slice %16 {offsets = [0, 240], sizes = [4, 16], strides = [1, 1]} : vector<4x256xf32> to vector<4x16xf32>
    %34 = vector.extract_strided_slice %16 {offsets = [0, 0], sizes = [4, 240], strides = [1, 1]} : vector<4x256xf32> to vector<4x240xf32>
    %35 = tpu.concatenate %33, %34 in 1 : vector<4x16xf32>, vector<4x240xf32> -> vector<4x256xf32>
    %36 = vector.extract_strided_slice %16 {offsets = [0, 16], sizes = [4, 240], strides = [1, 1]} : vector<4x256xf32> to vector<4x240xf32>
    %37 = vector.extract_strided_slice %16 {offsets = [0, 0], sizes = [4, 16], strides = [1, 1]} : vector<4x256xf32> to vector<4x16xf32>
    %38 = tpu.concatenate %36, %37 in 1 : vector<4x240xf32>, vector<4x16xf32> -> vector<4x256xf32>
    %39 = arith.select %10, %38, %35 : vector<4x256xi1>, vector<4x256xf32>
    %40 = arith.select %12, %35, %38 : vector<4x256xi1>, vector<4x256xf32>
    %41 = vector.extract_strided_slice %24 {offsets = [0, 240], sizes = [4, 16], strides = [1, 1]} : vector<4x256xf32> to vector<4x16xf32>
    %42 = vector.extract_strided_slice %24 {offsets = [0, 0], sizes = [4, 240], strides = [1, 1]} : vector<4x256xf32> to vector<4x240xf32>
    %43 = tpu.concatenate %41, %42 in 1 : vector<4x16xf32>, vector<4x240xf32> -> vector<4x256xf32>
    %44 = vector.extract_strided_slice %24 {offsets = [0, 16], sizes = [4, 240], strides = [1, 1]} : vector<4x256xf32> to vector<4x240xf32>
    %45 = vector.extract_strided_slice %24 {offsets = [0, 0], sizes = [4, 16], strides = [1, 1]} : vector<4x256xf32> to vector<4x16xf32>
    %46 = tpu.concatenate %44, %45 in 1 : vector<4x240xf32>, vector<4x16xf32> -> vector<4x256xf32>
    %47 = arith.select %10, %46, %43 : vector<4x256xi1>, vector<4x256xf32>
    %48 = arith.select %12, %43, %46 : vector<4x256xi1>, vector<4x256xf32>
    %49 = tpu.concatenate %31, %39, %47, %23, %16, %24, %32, %40, %48 in 0 : vector<4x256xf32>, vector<4x256xf32>, vector<4x256xf32>, vector<4x256xf32>, vector<4x256xf32>, vector<4x256xf32>, vector<4x256xf32>, vector<4x256xf32>, vector<4x256xf32> -> vector<36x256xf32>
    %cst = arith.constant dense<0.000000e+00> : vector<4x256xf32>
    %50 = tpu.matmul %13, %49, %cst {dimension_numbers = #tpu.dot_dimension_numbers<[1], [0], [0], [1], [0, 0, 1, 1], [], []>} : vector<4x36xf32>, vector<36x256xf32>, vector<4x256xf32> -> vector<4x256xf32>
    %cst_9 = arith.constant dense<0.000000e+00> : vector<4xf32>
    %51 = vector.multi_reduction <add>, %50, %cst_9 [1] : vector<4x256xf32> to vector<4xf32>
    %52 = vector.shape_cast %51 : vector<4xf32> to vector<4x1xf32>
    %53 = arith.mulf %50, %50 : vector<4x256xf32>
    %cst_10 = arith.constant dense<0.000000e+00> : vector<4xf32>
    %54 = vector.multi_reduction <add>, %53, %cst_10 [1] : vector<4x256xf32> to vector<4xf32>
    %55 = vector.shape_cast %54 : vector<4xf32> to vector<4x1xf32>
    %cst_11 = arith.constant 3.906250e-03 : f32
    %56 = vector.broadcast %cst_11 : f32 to vector<4x1xf32>
    %57 = arith.mulf %52, %56 : vector<4x1xf32>
    %cst_12 = arith.constant 3.906250e-03 : f32
    %58 = vector.broadcast %cst_12 : f32 to vector<4x1xf32>
    %59 = arith.mulf %55, %58 : vector<4x1xf32>
    %60 = arith.mulf %57, %57 : vector<4x1xf32>
    %61 = arith.subf %59, %60 : vector<4x1xf32>
    %cst_13 = arith.constant 0.000000e+00 : f32
    %62 = vector.broadcast %cst_13 : f32 to vector<4x1xf32>
    %63 = arith.maximumf %61, %62 : vector<4x1xf32>
    %64 = vector.broadcast %57 : vector<4x1xf32> to vector<4x256xf32>
    %65 = arith.subf %50, %64 : vector<4x256xf32>
    %cst_14 = arith.constant 9.99999974E-6 : f32
    %66 = vector.broadcast %cst_14 : f32 to vector<4x1xf32>
    %67 = arith.addf %63, %66 : vector<4x1xf32>
    %68 = math.rsqrt %67 : vector<4x1xf32>
    %69 = vector.broadcast %68 : vector<4x1xf32> to vector<4x256xf32>
    %70 = arith.mulf %65, %69 : vector<4x256xf32>
    %cst_15 = arith.constant 0.000000e+00 : f32
    %71 = vector.broadcast %cst_15 : f32 to vector<4x256xf32>
    %72 = arith.maximumf %70, %71 : vector<4x256xf32>
    %73 = vector.extract_strided_slice %72 {offsets = [0, 1], sizes = [4, 255], strides = [1, 1]} : vector<4x256xf32> to vector<4x255xf32>
    %74 = vector.extract_strided_slice %72 {offsets = [0, 0], sizes = [4, 1], strides = [1, 1]} : vector<4x256xf32> to vector<4x1xf32>
    %75 = tpu.concatenate %73, %74 in 1 : vector<4x255xf32>, vector<4x1xf32> -> vector<4x256xf32>
    %76 = vector.extract_strided_slice %72 {offsets = [0, 255], sizes = [4, 1], strides = [1, 1]} : vector<4x256xf32> to vector<4x1xf32>
    %77 = vector.extract_strided_slice %72 {offsets = [0, 0], sizes = [4, 255], strides = [1, 1]} : vector<4x256xf32> to vector<4x255xf32>
    %78 = tpu.concatenate %76, %77 in 1 : vector<4x1xf32>, vector<4x255xf32> -> vector<4x256xf32>
    %79 = arith.select %6, %75, %78 : vector<4x256xi1>, vector<4x256xf32>
    %80 = arith.select %8, %78, %75 : vector<4x256xi1>, vector<4x256xf32>
    %81 = vector.extract_strided_slice %79 {offsets = [0, 240], sizes = [4, 16], strides = [1, 1]} : vector<4x256xf32> to vector<4x16xf32>
    %82 = vector.extract_strided_slice %79 {offsets = [0, 0], sizes = [4, 240], strides = [1, 1]} : vector<4x256xf32> to vector<4x240xf32>
    %83 = tpu.concatenate %81, %82 in 1 : vector<4x16xf32>, vector<4x240xf32> -> vector<4x256xf32>
    %84 = vector.extract_strided_slice %79 {offsets = [0, 16], sizes = [4, 240], strides = [1, 1]} : vector<4x256xf32> to vector<4x240xf32>
    %85 = vector.extract_strided_slice %79 {offsets = [0, 0], sizes = [4, 16], strides = [1, 1]} : vector<4x256xf32> to vector<4x16xf32>
    %86 = tpu.concatenate %84, %85 in 1 : vector<4x240xf32>, vector<4x16xf32> -> vector<4x256xf32>
    %87 = arith.select %10, %86, %83 : vector<4x256xi1>, vector<4x256xf32>
    %88 = arith.select %12, %83, %86 : vector<4x256xi1>, vector<4x256xf32>
    %89 = vector.extract_strided_slice %72 {offsets = [0, 240], sizes = [4, 16], strides = [1, 1]} : vector<4x256xf32> to vector<4x16xf32>
    %90 = vector.extract_strided_slice %72 {offsets = [0, 0], sizes = [4, 240], strides = [1, 1]} : vector<4x256xf32> to vector<4x240xf32>
    %91 = tpu.concatenate %89, %90 in 1 : vector<4x16xf32>, vector<4x240xf32> -> vector<4x256xf32>
    %92 = vector.extract_strided_slice %72 {offsets = [0, 16], sizes = [4, 240], strides = [1, 1]} : vector<4x256xf32> to vector<4x240xf32>
    %93 = vector.extract_strided_slice %72 {offsets = [0, 0], sizes = [4, 16], strides = [1, 1]} : vector<4x256xf32> to vector<4x16xf32>
    %94 = tpu.concatenate %92, %93 in 1 : vector<4x240xf32>, vector<4x16xf32> -> vector<4x256xf32>
    %95 = arith.select %10, %94, %91 : vector<4x256xi1>, vector<4x256xf32>
    %96 = arith.select %12, %91, %94 : vector<4x256xi1>, vector<4x256xf32>
    %97 = vector.extract_strided_slice %80 {offsets = [0, 240], sizes = [4, 16], strides = [1, 1]} : vector<4x256xf32> to vector<4x16xf32>
    %98 = vector.extract_strided_slice %80 {offsets = [0, 0], sizes = [4, 240], strides = [1, 1]} : vector<4x256xf32> to vector<4x240xf32>
    %99 = tpu.concatenate %97, %98 in 1 : vector<4x16xf32>, vector<4x240xf32> -> vector<4x256xf32>
    %100 = vector.extract_strided_slice %80 {offsets = [0, 16], sizes = [4, 240], strides = [1, 1]} : vector<4x256xf32> to vector<4x240xf32>
    %101 = vector.extract_strided_slice %80 {offsets = [0, 0], sizes = [4, 16], strides = [1, 1]} : vector<4x256xf32> to vector<4x16xf32>
    %102 = tpu.concatenate %100, %101 in 1 : vector<4x240xf32>, vector<4x16xf32> -> vector<4x256xf32>
    %103 = arith.select %10, %102, %99 : vector<4x256xi1>, vector<4x256xf32>
    %104 = arith.select %12, %99, %102 : vector<4x256xi1>, vector<4x256xf32>
    %105 = tpu.concatenate %87, %95, %103, %79, %72, %80, %88, %96, %104 in 0 : vector<4x256xf32>, vector<4x256xf32>, vector<4x256xf32>, vector<4x256xf32>, vector<4x256xf32>, vector<4x256xf32>, vector<4x256xf32>, vector<4x256xf32>, vector<4x256xf32> -> vector<36x256xf32>
    %cst_16 = arith.constant dense<0.000000e+00> : vector<4x256xf32>
    %106 = tpu.matmul %14, %105, %cst_16 {dimension_numbers = #tpu.dot_dimension_numbers<[1], [0], [0], [1], [0, 0, 1, 1], [], []>} : vector<4x36xf32>, vector<36x256xf32>, vector<4x256xf32> -> vector<4x256xf32>
    %cst_17 = arith.constant dense<0.000000e+00> : vector<4xf32>
    %107 = vector.multi_reduction <add>, %106, %cst_17 [1] : vector<4x256xf32> to vector<4xf32>
    %108 = vector.shape_cast %107 : vector<4xf32> to vector<4x1xf32>
    %109 = arith.mulf %106, %106 : vector<4x256xf32>
    %cst_18 = arith.constant dense<0.000000e+00> : vector<4xf32>
    %110 = vector.multi_reduction <add>, %109, %cst_18 [1] : vector<4x256xf32> to vector<4xf32>
    %111 = vector.shape_cast %110 : vector<4xf32> to vector<4x1xf32>
    %cst_19 = arith.constant 3.906250e-03 : f32
    %112 = vector.broadcast %cst_19 : f32 to vector<4x1xf32>
    %113 = arith.mulf %108, %112 : vector<4x1xf32>
    %cst_20 = arith.constant 3.906250e-03 : f32
    %114 = vector.broadcast %cst_20 : f32 to vector<4x1xf32>
    %115 = arith.mulf %111, %114 : vector<4x1xf32>
    %116 = arith.mulf %113, %113 : vector<4x1xf32>
    %117 = arith.subf %115, %116 : vector<4x1xf32>
    %cst_21 = arith.constant 0.000000e+00 : f32
    %118 = vector.broadcast %cst_21 : f32 to vector<4x1xf32>
    %119 = arith.maximumf %117, %118 : vector<4x1xf32>
    %120 = vector.broadcast %113 : vector<4x1xf32> to vector<4x256xf32>
    %121 = arith.subf %106, %120 : vector<4x256xf32>
    %cst_22 = arith.constant 9.99999974E-6 : f32
    %122 = vector.broadcast %cst_22 : f32 to vector<4x1xf32>
    %123 = arith.addf %119, %122 : vector<4x1xf32>
    %124 = math.rsqrt %123 : vector<4x1xf32>
    %125 = vector.broadcast %124 : vector<4x1xf32> to vector<4x256xf32>
    %126 = arith.mulf %121, %125 : vector<4x256xf32>
    %127 = arith.addf %16, %126 : vector<4x256xf32>
    %c0_23 = arith.constant 0 : index
    %c0_24 = arith.constant 0 : index
    %c0_25 = arith.constant 0 : index
    %128 = vector.load %arg4[%c0_23, %c0_24, %c0_25] : memref<1x4x256xf32, #tpu.memory_space<vmem>>, vector<1x4x256xf32>
    %129 = vector.shape_cast %128 : vector<1x4x256xf32> to vector<4x256xf32>
    %130 = vector.shape_cast %127 : vector<4x256xf32> to vector<1x4x256xf32>
    tpu.vector_store %arg4[%c0_23, %c0_24, %c0_25], %130 {strides = array<i32>} : memref<1x4x256xf32, #tpu.memory_space<vmem>>, vector<1x4x256xf32>,
    return
  }
  func.func @transform_0(%arg0: i32) -> (i32, i32, i32) {
    %c0_i32 = arith.constant 0 : i32
    %c0_i32_0 = arith.constant 0 : i32
    %c0_i32_1 = arith.constant 0 : i32
    return %arg0, %c0_i32, %c0_i32_0 : i32, i32, i32
  }
  func.func @transform_1(%arg0: i32) -> (i32, i32) {
    %c0_i32 = arith.constant 0 : i32
    %c0_i32_0 = arith.constant 0 : i32
    %c0_i32_1 = arith.constant 0 : i32
    return %c0_i32, %c0_i32_0 : i32, i32
  }
  func.func @transform_2(%arg0: i32) -> (i32, i32) {
    %c0_i32 = arith.constant 0 : i32
    %c0_i32_0 = arith.constant 0 : i32
    %c0_i32_1 = arith.constant 0 : i32
    return %c0_i32, %c0_i32_0 : i32, i32
  }
  func.func @transform_3(%arg0: i32) -> (i32, i32, i32) {
    %c0_i32 = arith.constant 0 : i32
    %c0_i32_0 = arith.constant 0 : i32
    %c0_i32_1 = arith.constant 0 : i32
    return %arg0, %c0_i32, %c0_i32_0 : i32, i32, i32
  }
}

</mosaic_0001>

<llo_original>
// kernel: tpu_custom_call.1
$region0: #{tpu_custom_call.1}
  #allocation0 [shape = 'u32[]', space=smem, size = 0x4, offset = 0x4, fixed_abs, tag = 'smem constant byte address 0x4 - core index']
  #allocation1 [shape = 'u32[72,128]{1,0:T(1,128)}', space=vmem, size = 0x9000, scoped, tag = 'internal scratch']
  %s0 = inlined_call_operand.hbm [shape: f32[2,4,256], index: 0, kind: input, shape index: {}]
  %s1 = inlined_call_operand.hbm [shape: f32[4,36], index: 1, kind: input, shape index: {}]
  %s2 = inlined_call_operand.hbm [shape: f32[4,36], index: 2, kind: input, shape index: {}]
  %s3 = inlined_call_operand.hbm [shape: f32[2,4,256], index: 3, kind: output, shape index: {}]
  %s4 = sld [smem:[#allocation0]]
  $region57: #{tpu_custom_call.1} parent=0
    _
  %s6 = ssub.s32 1, %s4
  %s7 = scalar_select 0, %s6, %s4
  $region1: #{tpu_custom_call.1} parent=0
    #allocation2 [shape = 'u8[8192]{0}', space=vmem, size = 0x2000, scoped, tag = 'input window, operand 0']
    #allocation3 [shape = 's32[2]{0}', space=sflag, size = 0x8, scoped, tag = 'scoped memory for tpu_custom_call.1']
    #allocation4 [shape = 's32[2]{0}', space=sflag, size = 0x8, scoped, tag = 'scoped memory for tpu_custom_call.1']
    #allocation5 [shape = 'u8[2048]{0}', space=vmem, size = 0x800, scoped, tag = 'input window, operand 1, single buffered']
    #allocation6 [shape = 's32[1]{0}', space=sflag, size = 0x4, scoped, tag = 'scoped memory for tpu_custom_call.1']
    #allocation7 [shape = 'u8[2048]{0}', space=vmem, size = 0x800, scoped, tag = 'input window, operand 2, single buffered']
    #allocation8 [shape = 'u8[8192]{0}', space=vmem, size = 0x2000, scoped, tag = 'output window, operand 0']
    %8 = vsyncpa [#allocation3], 0
    %s9 = scalar_lea.sflag [#allocation3], 1
    %10 = vsyncpa %s9, 0
    %11 = vsyncpa [#allocation6], 0
    %12 = vsyncpa [#allocation4], 0
    %s13 = scalar_lea.sflag [#allocation4], 1
    %14 = vsyncpa %s13, 0
    loop: start=0, step=1, limit=4
    $region2: #{tpu_custom_call.1} parent=1 // loop_pre_header
      _
    $region3: #{tpu_custom_call.1} parent=1 // loop_header
      %s16 = sphi 0, %s20
      %p17 = scmp.ge.s32.totalorder %s16, 4
      %s26 = sphi 0, %s28
      %s29 = sphi 0, %s26
      %s30 = sphi 0, %s29
      %s46 = sphi 0, %s30
      %s50 = sphi 0, %s50
      %s52 = sphi 0, %s50
      %s53 = sphi 0, %s52
      %s67 = sphi 0, %s53
      %s71 = sphi 0, %s71
      %s73 = sphi 0, %s71
      %s74 = sphi 0, %s73
      %s88 = sphi 0, %s74
      %s94 = sphi 0, %s96
      %s97 = sphi 0, %s94
      %s98 = sphi 0, %s97
      %s114 = sphi 0, %s98
    $region4: #{tpu_custom_call.1} parent=1 // loop_header_branch
      %19 = sbr.rel (%p17) target = $region8
    $region5: #{tpu_custom_call.1} parent=1 // loop_body
      %s21 = ssub.s32 %s16, 1
      %s22 = ssub.s32 %s16, 2
      %s23 = sadd.s32 %s16, 1
      %s24 = ssub.s32 %s16, %s23
      %p25 = scmp.eq.s32.totalorder %s24, 0
      %s27 = sadd.s32 %s26, 1
      %s28 = scalar_select %p25, %s26, %s27
      %p31 = pneg %p25
      %p32 = scmp.eq.s32.totalorder %s16, 1
      %p33 = por %p31, %p32
      %p34 = scmp.ne.s32.totalorder %s26, %s29
      %p35 = scmp.eq.s32.totalorder %s16, 0
      %p36 = por %p34, %p35
      %p37 = scmp.ne.s32.totalorder %s26, %s29
      %p38 = scmp.eq.s32.totalorder %s21, 1
      %p39 = por %p37, %p38
      %p40 = scmp.ne.s32.totalorder %s29, %s30
      %p41 = scmp.eq.s32.totalorder %s21, 0
      %p42 = por %p40, %p41
      %p43 = scmp.ne.s32.totalorder %s29, %s30
      %p44 = scmp.eq.s32.totalorder %s22, 1
      %p45 = por %p43, %p44
      %p47 = scmp.ne.s32.totalorder %s30, %s46
      %p48 = scmp.eq.s32.totalorder %s22, 0
      %p49 = por %p47, %p48
      %s51 = sadd.s32 %s50, 1
      %p54 = scmp.eq.s32.totalorder %s16, 1
      %p55 = scmp.ne.s32.totalorder %s50, %s52
      %p56 = scmp.eq.s32.totalorder %s16, 0
      %p57 = por %p55, %p56
      %p58 = scmp.ne.s32.totalorder %s50, %s52
      %p59 = scmp.eq.s32.totalorder %s21, 1
      %p60 = por %p58, %p59
      %p61 = scmp.ne.s32.totalorder %s52, %s53
      %p62 = scmp.eq.s32.totalorder %s21, 0
      %p63 = por %p61, %p62
      %p64 = scmp.ne.s32.totalorder %s52, %s53
      %p65 = scmp.eq.s32.totalorder %s22, 1
      %p66 = por %p64, %p65
      %p68 = scmp.ne.s32.totalorder %s53, %s67
      %p69 = scmp.eq.s32.totalorder %s22, 0
      %p70 = por %p68, %p69
      %s72 = sadd.s32 %s71, 1
      %p75 = scmp.eq.s32.totalorder %s16, 1
      %p76 = scmp.ne.s32.totalorder %s71, %s73
      %p77 = scmp.eq.s32.totalorder %s16, 0
      %p78 = por %p76, %p77
      %p79 = scmp.ne.s32.totalorder %s71, %s73
      %p80 = scmp.eq.s32.totalorder %s21, 1
      %p81 = por %p79, %p80
      %p82 = scmp.ne.s32.totalorder %s73, %s74
      %p83 = scmp.eq.s32.totalorder %s21, 0
      %p84 = por %p82, %p83
      %p85 = scmp.ne.s32.totalorder %s73, %s74
      %p86 = scmp.eq.s32.totalorder %s22, 1
      %p87 = por %p85, %p86
      %p89 = scmp.ne.s32.totalorder %s74, %s88
      %p90 = scmp.eq.s32.totalorder %s22, 0
      %p91 = por %p89, %p90
      %s92 = ssub.s32 %s16, %s23
      %p93 = scmp.eq.s32.totalorder %s92, 0
      %s95 = sadd.s32 %s94, 1
      %s96 = scalar_select %p93, %s94, %s95
      %p99 = pneg %p93
      %p100 = scmp.eq.s32.totalorder %s16, 1
      %p101 = por %p99, %p100
      %p102 = scmp.ne.s32.totalorder %s94, %s97
      %p103 = scmp.eq.s32.totalorder %s16, 0
      %p104 = por %p102, %p103
      %p105 = scmp.ne.s32.totalorder %s94, %s97
      %p106 = scmp.eq.s32.totalorder %s21, 1
      %p107 = por %p105, %p106
      %p108 = scmp.ne.s32.totalorder %s97, %s98
      %p109 = scmp.eq.s32.totalorder %s21, 0
      %p110 = por %p108, %p109
      %p111 = scmp.ne.s32.totalorder %s97, %s98
      %p112 = scmp.eq.s32.totalorder %s22, 1
      %p113 = por %p111, %p112
      %p115 = scmp.ne.s32.totalorder %s98, %s114
      %p116 = scmp.eq.s32.totalorder %s22, 0
      %p117 = por %p115, %p116
      %p118 = scmp.le.s32.totalorder 1, %s16
      %p119 = scmp.lt.s32.totalorder %s16, 3
      %p120 = pnand %p118, %p119
      %p121 = pneg %p120
      // Predicated region
      $region9: #{tpu_custom_call.1} parent=5 // pred_check
        _
      $region10: #{tpu_custom_call.1} parent=5 // pred_check_branch
        %123 = sbr.rel (%p120) target = $region12
      $region11: #{tpu_custom_call.1} parent=5 // pred_region
        %s124 = ssub.s32 %s16, 1
        // Predicated region
        $region13: #{tpu_custom_call.1} parent=11 // pred_check
          %p125 = pneg %p63
        $region14: #{tpu_custom_call.1} parent=11 // pred_check_branch
          %127 = sbr.rel (%p125) target = $region16
        $region15: #{tpu_custom_call.1} parent=11 // pred_region
          %129 = vsyncadd [#allocation6], 0
          %s131 = sshll.u32 %s1, 4
          %s132 = int_to_ptr.hbm [resolvable:$true] %s131
          %s133 = sshll.u32 [#allocation5], 4
          %s134 = int_to_ptr.vmem [resolvable:$true] %s133
          %136 = dma.hbm_to_vmem [thread:$0]  %s132, 64, %s134, [#allocation6]
        $region16: #{tpu_custom_call.1} parent=11 // pred_fallthru
          _
        // Predicated region
        $region17: #{tpu_custom_call.1} parent=11 // pred_check
          %p137 = pneg %p84
        $region18: #{tpu_custom_call.1} parent=11 // pred_check_branch
          %139 = sbr.rel (%p137) target = $region20
        $region19: #{tpu_custom_call.1} parent=11 // pred_region
          %141 = vsyncadd [#allocation6], 0
          %s143 = sshll.u32 %s2, 4
          %s144 = int_to_ptr.hbm [resolvable:$true] %s143
          %s145 = sshll.u32 [#allocation7], 4
          %s146 = int_to_ptr.vmem [resolvable:$true] %s145
          %148 = dma.hbm_to_vmem [thread:$0]  %s144, 64, %s146, [#allocation6]
        $region20: #{tpu_custom_call.1} parent=11 // pred_fallthru
          _
      $region12: #{tpu_custom_call.1} parent=5 // pred_fallthru
        _
      %p149 = scmp.lt.s32.totalorder %s16, 2
      // Predicated region
      $region21: #{tpu_custom_call.1} parent=5 // pred_check
        %p150 = pneg %p149
      $region22: #{tpu_custom_call.1} parent=5 // pred_check_branch
        %152 = sbr.rel (%p150) target = $region24
      $region23: #{tpu_custom_call.1} parent=5 // pred_region
        // Predicated region
        $region25: #{tpu_custom_call.1} parent=23 // pred_check
          %p153 = pneg %p36
        $region26: #{tpu_custom_call.1} parent=23 // pred_check_branch
          %155 = sbr.rel (%p153) target = $region28
        $region27: #{tpu_custom_call.1} parent=23 // pred_region
          %s156 = sand.u32 %s26, 1
          %s157 = scalar_lea.sflag [#allocation3], %s156
          %s158 = sand.u32 %s26, 1
          %s159 = smul.addr %s158, 8
          %s160 = scalar_lea.vmem [#allocation2], %s159
          %162 = vsyncadd %s157, 0
          %s163 = smul.addr %s16, 2
          %s164 = smul.addr %s163, 4
          %s165 = scalar_lea.hbm %s0, %s164
          %s167 = sshll.u32 %s165, 4
          %s168 = int_to_ptr.hbm [resolvable:$true] %s167
          %s169 = sshll.u32 %s160, 4
          %s170 = int_to_ptr.vmem [resolvable:$true] %s169
          %172 = dma.hbm_to_vmem [thread:$0]  %s168, 128, %s170, %s157
        $region28: #{tpu_custom_call.1} parent=23 // pred_fallthru
          _
      $region24: #{tpu_custom_call.1} parent=5 // pred_fallthru
        _
      %p173 = scmp.le.s32.totalorder 1, %s16
      %p174 = scmp.lt.s32.totalorder %s16, 3
      %p175 = pnand %p173, %p174
      %p176 = pneg %p175
      // Predicated region
      $region29: #{tpu_custom_call.1} parent=5 // pred_check
        _
      $region30: #{tpu_custom_call.1} parent=5 // pred_check_branch
        %178 = sbr.rel (%p175) target = $region32
      $region31: #{tpu_custom_call.1} parent=5 // pred_region
        %s179 = ssub.s32 %s16, 1
        %s180 = sand.u32 %s29, 1
        %s181 = scalar_lea.sflag [#allocation3], %s180
        %s182 = sand.u32 %s29, 1
        %s183 = smul.addr %s182, 8
        %s184 = scalar_lea.vmem [#allocation2], %s183
        // Predicated region
        $region33: #{tpu_custom_call.1} parent=31 // pred_check
          %p185 = pneg %p42
        $region34: #{tpu_custom_call.1} parent=31 // pred_check_branch
          %187 = sbr.rel (%p185) target = $region36
        $region35: #{tpu_custom_call.1} parent=31 // pred_region
          %189 = dma.done %s181, 128
        $region36: #{tpu_custom_call.1} parent=31 // pred_fallthru
          _
        // Predicated region
        $region37: #{tpu_custom_call.1} parent=31 // pred_check
          %p190 = pneg %p63
        $region38: #{tpu_custom_call.1} parent=31 // pred_check_branch
          %192 = sbr.rel (%p190) target = $region40
        $region39: #{tpu_custom_call.1} parent=31 // pred_region
          %194 = dma.done [#allocation6], 64
        $region40: #{tpu_custom_call.1} parent=31 // pred_fallthru
          _
        // Predicated region
        $region41: #{tpu_custom_call.1} parent=31 // pred_check
          %p195 = pneg %p84
        $region42: #{tpu_custom_call.1} parent=31 // pred_check_branch
          %197 = sbr.rel (%p195) target = $region44
        $region43: #{tpu_custom_call.1} parent=31 // pred_region
          %199 = dma.done [#allocation6], 64
        $region44: #{tpu_custom_call.1} parent=31 // pred_fallthru
          _
        %s200 = sand.u32 %s29, 1
        %s201 = scalar_lea.sflag [#allocation3], %s200
        %s202 = sand.u32 %s29, 1
        %s203 = smul.addr %s202, 8
        %s204 = scalar_lea.vmem [#allocation2], %s203
        %p205 = pneg %p42
        %p206 = pneg %p39
        %p207 = pneg %p63
        %p208 = pneg %p60
        %p209 = pneg %p84
        %p210 = pneg %p81
        %p211 = pneg %p110
        %p212 = pneg %p107
        %s213 = sand.u32 %s97, 1
        %s214 = scalar_lea.sflag [#allocation4], %s213
        %s215 = sand.u32 %s97, 1
        %s216 = smul.addr %s215, 8
        %s217 = scalar_lea.vmem [#allocation8], %s216
        %v218 = vlaneseq
        %v219 = vand.u32 %v218, 127
        %v220 = vadd.s32 %v219, 128
        %v221 = vand.u32 %v219, 15
        %v222 = vand.u32 %v220, 15
        %v223 = vshra.s32 %v219, 4
        %v224 = vshra.s32 %v220, 4
        %vm225 = vcmp.eq.s32.totalorder %v221, 0
        %vm226 = vcmp.eq.s32.totalorder %v222, 0
        %vm227 = vcmp.eq.s32.totalorder %v221, 15
        %vm228 = vcmp.eq.s32.totalorder %v222, 15
        %vm229 = vcmp.eq.s32.totalorder %v223, 0
        %vm230 = vcmp.eq.s32.totalorder %v224, 0
        %vm231 = vcmp.eq.s32.totalorder %v223, 15
        %vm232 = vcmp.eq.s32.totalorder %v224, 15
        %v233 = vld [vmem:[#allocation5] sm:$0xf]
        %v234 = vld [vmem:[#allocation7] sm:$0xf]
        %v235 = vld [vmem:[%s184] sm:$0xff]
        %237 = vst [vmem:[#allocation1] ss:$2 sm:$0xff] %v235
        %v238 = vld.sshfl [vmem:[#allocation1] sm:$0xff pattern:$0x75316420]
        %v239 = vld.sshfl [vmem:[#allocation1 + $0x8] sm:$0xff pattern:$0x75316420]
        %240 = vrot.lane.b32.xlu0 %v238, 127
        %v241 = vpop.permute.xlu0 %240
        %242 = vrot.lane.b32.xlu0 %v239, 127
        %v243 = vpop.permute.xlu0 %242
        %vm244 = vcmask 1039360
        %v245 = vsel %vm244, %v241, %v243
        %248 = vst [vmem:[#allocation1] ss:$2 sm:$0xff] %v235
        %v249 = vld.sshfl [vmem:[#allocation1] sm:$0xff pattern:$0x75316420]
        %250 = vrot.lane.b32.xlu0 %v249, 127
        %v251 = vpop.permute.xlu0 %250
        %v253 = vsel %vm244, %v243, %v251
        %254 = vst [vmem:[#allocation1] ss:$2 sm:$0xff] %v235
        %v255 = vld.sshfl [vmem:[#allocation1 + $0x8] sm:$0xff pattern:$0x75316420]
        %256 = vrot.lane.b32.xlu0 %v255, 1
        %v257 = vpop.permute.xlu0 %256
        %259 = vst [vmem:[#allocation1] ss:$2 sm:$0xff] %v235
        %v260 = vld.sshfl [vmem:[#allocation1] sm:$0xff pattern:$0x75316420]
        %v261 = vld.sshfl [vmem:[#allocation1 + $0x8] sm:$0xff pattern:$0x75316420]
        %262 = vrot.lane.b32.xlu0 %v260, 1
        %v263 = vpop.permute.xlu0 %262
        %264 = vrot.lane.b32.xlu0 %v261, 1
        %v265 = vpop.permute.xlu0 %264
        %vm266 = vcmask 7168
        %v267 = vsel %vm266, %v263, %v265
        %v270 = vsel %vm266, %v257, %v263
        %v271 = vsel %vm225, %v245, %v270
        %v272 = vsel %vm226, %v253, %v267
        %v273 = vsel %vm227, %v270, %v245
        %v274 = vsel %vm228, %v267, %v253
        %276 = vrot.lane.b32.xlu0 %v272, 16
        %v277 = vpop.permute.xlu0 %276
        %280 = vrot.lane.b32.xlu0 %v271, 16
        %v281 = vpop.permute.xlu0 %280
        %vm282 = vcmask 130048
        %v283 = vsel %vm282, %v281, %v277
        %v286 = vsel %vm282, %v277, %v281
        %287 = vrot.lane.b32.xlu0 %v271, 112
        %v288 = vpop.permute.xlu0 %287
        %289 = vrot.lane.b32.xlu0 %v272, 112
        %v290 = vpop.permute.xlu0 %289
        %vm291 = vcmask 916480
        %v292 = vsel %vm291, %v288, %v290
        %v296 = vsel %vm291, %v290, %v288
        %v297 = vsel %vm229, %v292, %v286
        %v298 = vsel %vm230, %v296, %v283
        %v299 = vsel %vm231, %v286, %v292
        %v300 = vsel %vm232, %v283, %v296
        %301 = vst [vmem:[#allocation1] ss:$2 sm:$0xff] %v235
        %v302 = vld.sshfl [vmem:[#allocation1 + $0x8] sm:$0xff pattern:$0x75316420]
        %303 = vrot.lane.b32.xlu0 %v302, 16
        %v304 = vpop.permute.xlu0 %303
        %306 = vst [vmem:[#allocation1] ss:$2 sm:$0xff] %v235
        %v307 = vld.sshfl [vmem:[#allocation1] sm:$0xff pattern:$0x75316420]
        %v308 = vld.sshfl [vmem:[#allocation1 + $0x8] sm:$0xff pattern:$0x75316420]
        %309 = vrot.lane.b32.xlu0 %v307, 16
        %v310 = vpop.permute.xlu0 %309
        %311 = vrot.lane.b32.xlu0 %v308, 16
        %v312 = vpop.permute.xlu0 %311
        %v313 = vsel %vm282, %v310, %v312
        %v316 = vsel %vm282, %v304, %v310
        %317 = vst [vmem:[#allocation1] ss:$2 sm:$0xff] %v235
        %v318 = vld.sshfl [vmem:[#allocation1] sm:$0xff pattern:$0x75316420]
        %v319 = vld.sshfl [vmem:[#allocation1 + $0x8] sm:$0xff pattern:$0x75316420]
        %320 = vrot.lane.b32.xlu0 %v318, 112
        %v321 = vpop.permute.xlu0 %320
        %322 = vrot.lane.b32.xlu0 %v319, 112
        %v323 = vpop.permute.xlu0 %322
        %v324 = vsel %vm291, %v321, %v323
        %327 = vst [vmem:[#allocation1] ss:$2 sm:$0xff] %v235
        %v328 = vld.sshfl [vmem:[#allocation1] sm:$0xff pattern:$0x75316420]
        %329 = vrot.lane.b32.xlu0 %v328, 112
        %v330 = vpop.permute.xlu0 %329
        %v332 = vsel %vm291, %v323, %v330
        %v333 = vsel %vm229, %v324, %v316
        %v334 = vsel %vm230, %v332, %v313
        %v335 = vsel %vm231, %v316, %v324
        %v336 = vsel %vm232, %v313, %v332
        %338 = vrot.lane.b32.xlu0 %v274, 16
        %v339 = vpop.permute.xlu0 %338
        %342 = vrot.lane.b32.xlu0 %v273, 16
        %v343 = vpop.permute.xlu0 %342
        %v344 = vsel %vm282, %v343, %v339
        %v347 = vsel %vm282, %v339, %v343
        %348 = vrot.lane.b32.xlu0 %v273, 112
        %v349 = vpop.permute.xlu0 %348
        %350 = vrot.lane.b32.xlu0 %v274, 112
        %v351 = vpop.permute.xlu0 %350
        %v352 = vsel %vm291, %v349, %v351
        %v356 = vsel %vm291, %v351, %v349
        %v357 = vsel %vm229, %v352, %v347
        %v358 = vsel %vm230, %v356, %v344
        %v359 = vsel %vm231, %v347, %v352
        %v360 = vsel %vm232, %v344, %v356
        %v363 = vrot.slane %v333, 4
        %v364 = vrot.slane %v334, 4
        %v367 = vrot.slane %v271, 4
        %v368 = vrot.slane %v272, 4
        %371 = vst [vmem:[#allocation1] ss:$2 sm:$0xff] %v235
        %v372 = vld.sshfl [vmem:[#allocation1] sm:$0xff pattern:$0x75316420]
        %v373 = vld.sshfl [vmem:[#allocation1 + $0x8] sm:$0xff pattern:$0x75316420]
        %v376 = vrot.slane %v273, 4
        %v377 = vrot.slane %v274, 4
        %v382 = vrot.slane %v335, 4
        %v383 = vrot.slane %v336, 4
        %vm386 = vcmask 1043456
        %v387 = vsel %vm386, %v297, %v363
        %v388 = vsel %vm386, %v298, %v364
        %v389 = vsel %vm386, %v357, %v367
        %v390 = vsel %vm386, %v358, %v368
        %v391 = vsel %vm386, %v372, %v376
        %v392 = vsel %vm386, %v373, %v377
        %v393 = vsel %vm386, %v299, %v382
        %v394 = vsel %vm386, %v300, %v383
        %vm395 = vcmask 293888
        %v397 = vsel %vm395, %v233, 0
        %v400 = vsel %vm386, %v359, 0
        %v403 = vsel %vm386, %v360, 0
        %405 = vmatpush.msra.mxu0 0.0
        %406 = vmatpush.msra.mxu0 0.0
        %407 = vmatpush.msra.mxu0 0.0
        %408 = vmatpush.msra.mxu0 0.0
        %409 = vmatpush.msra.mxu0 0.0
        %410 = vmatpush.msra.mxu0 0.0
        %411 = vmatpush.msra.mxu0 0.0
        %412 = vmatpush.msra.mxu0 0.0
        %413 = vmatpush.msra.mxu0 0.0
        %414 = vmatpush.msra.mxu0 0.0
        %415 = vmatpush.msra.mxu0 0.0
        %416 = vmatpush.msra.mxu0 %v400
        %417 = vmatpush.msra.mxu0 %v393
        %418 = vmatpush.msra.mxu0 %v391
        %419 = vmatpush.msra.mxu0 %v389
        %420 = vmatpush.msra.mxu0 %v387
        %421 = vmatmul.f32.gmra.mxu0 %v397
        %v422 = vpop.f32.mrf.mxu0
        %v423 = vadd.f32 0.0, %v422
        %424 = vdwg.mxu0
        %425 = vmatpush.msra.mxu0 0.0
        %426 = vmatpush.msra.mxu0 0.0
        %427 = vmatpush.msra.mxu0 0.0
        %428 = vmatpush.msra.mxu0 0.0
        %429 = vmatpush.msra.mxu0 0.0
        %430 = vmatpush.msra.mxu0 0.0
        %431 = vmatpush.msra.mxu0 0.0
        %432 = vmatpush.msra.mxu0 0.0
        %433 = vmatpush.msra.mxu0 0.0
        %434 = vmatpush.msra.mxu0 0.0
        %435 = vmatpush.msra.mxu0 0.0
        %436 = vmatpush.msra.mxu0 %v403
        %437 = vmatpush.msra.mxu0 %v394
        %438 = vmatpush.msra.mxu0 %v392
        %439 = vmatpush.msra.mxu0 %v390
        %440 = vmatpush.msra.mxu0 %v388
        %441 = vmatmul.f32.gmra.mxu0 %v397
        %v442 = vpop.f32.mrf.mxu0
        %v443 = vadd.f32 0.0, %v442
        %444 = vdwg.mxu0
        %v445 = vsel %vm386, %v423, 0.0
        %v446 = vsel %vm386, %v443, 0.0
        %v447 = vadd.f32 %v445, %v446
        %448 = vadd.xlane.f32.xlu0 %v447
        %v449 = vpop.xlane.xlu0 %448
        %v450 = vmul.f32 %v423, %v423
        %v451 = vmul.f32 %v443, %v443
        %v452 = vsel %vm386, %v450, 0.0
        %v453 = vsel %vm386, %v451, 0.0
        %v454 = vadd.f32 %v452, %v453
        %455 = vadd.xlane.f32.xlu0 %v454
        %v456 = vpop.xlane.xlu0 %455
        %v457 = vmul.f32 %v449, 0.00390625
        %v458 = vmul.f32 %v456, 0.00390625
        %v459 = vmul.f32 %v457, %v457
        %v460 = vsub.f32 %v458, %v459
        %v461 = vmax.f32 %v460, 0.0
        %v462 = vsub.f32 %v423, %v457
        %v463 = vsub.f32 %v443, %v457
        %v464 = vadd.f32 %v461, 1e-05
        %v465 = vrsqrt.pop %v464
        %v466 = vmul.f32 %v465, %v464
        %v467 = vmul.f32 %v466, %v465
        %v468 = vmul.f32 0.5, %v467
        %v469 = vsub.f32 1.5, %v468
        %v470 = vmul.f32 %v465, %v469
        %vm471 = vweird.f32 %v464
        %vm472 = vweird.f32 %v465
        %vm473 = vmor %vm471, %vm472
        %v474 = vsel %vm473, %v465, %v470
        %v475 = vmul.f32 %v462, %v474
        %v476 = vmul.f32 %v463, %v474
        %v477 = vmax.f32 %v475, 0.0
        %v478 = vmax.f32 %v476, 0.0
        %481 = vrot.lane.b32.xlu0 %v477, 127
        %v482 = vpop.permute.xlu0 %481
        %483 = vrot.lane.b32.xlu0 %v478, 127
        %v484 = vpop.permute.xlu0 %483
        %v485 = vsel %vm244, %v482, %v484
        %v489 = vsel %vm244, %v484, %v482
        %490 = vrot.lane.b32.xlu0 %v478, 1
        %v491 = vpop.permute.xlu0 %490
        %493 = vrot.lane.b32.xlu0 %v477, 1
        %v494 = vpop.permute.xlu0 %493
        %v495 = vsel %vm266, %v494, %v491
        %v498 = vsel %vm266, %v491, %v494
        %v499 = vsel %vm225, %v485, %v498
        %v500 = vsel %vm226, %v489, %v495
        %v501 = vsel %vm227, %v498, %v485
        %v502 = vsel %vm228, %v495, %v489
        %504 = vrot.lane.b32.xlu0 %v500, 16
        %v505 = vpop.permute.xlu0 %504
        %508 = vrot.lane.b32.xlu0 %v499, 16
        %v509 = vpop.permute.xlu0 %508
        %v510 = vsel %vm282, %v509, %v505
        %v513 = vsel %vm282, %v505, %v509
        %514 = vrot.lane.b32.xlu0 %v499, 112
        %v515 = vpop.permute.xlu0 %514
        %516 = vrot.lane.b32.xlu0 %v500, 112
        %v517 = vpop.permute.xlu0 %516
        %v518 = vsel %vm291, %v515, %v517
        %v522 = vsel %vm291, %v517, %v515
        %v523 = vsel %vm229, %v518, %v513
        %v524 = vsel %vm230, %v522, %v510
        %v525 = vsel %vm231, %v513, %v518
        %v526 = vsel %vm232, %v510, %v522
        %527 = vrot.lane.b32.xlu0 %v478, 16
        %v528 = vpop.permute.xlu0 %527
        %530 = vrot.lane.b32.xlu0 %v477, 16
        %v531 = vpop.permute.xlu0 %530
        %v532 = vsel %vm282, %v531, %v528
        %v535 = vsel %vm282, %v528, %v531
        %536 = vrot.lane.b32.xlu0 %v477, 112
        %v537 = vpop.permute.xlu0 %536
        %538 = vrot.lane.b32.xlu0 %v478, 112
        %v539 = vpop.permute.xlu0 %538
        %v540 = vsel %vm291, %v537, %v539
        %v544 = vsel %vm291, %v539, %v537
        %v545 = vsel %vm229, %v540, %v535
        %v546 = vsel %vm230, %v544, %v532
        %v547 = vsel %vm231, %v535, %v540
        %v548 = vsel %vm232, %v532, %v544
        %550 = vrot.lane.b32.xlu0 %v502, 16
        %v551 = vpop.permute.xlu0 %550
        %554 = vrot.lane.b32.xlu0 %v501, 16
        %v555 = vpop.permute.xlu0 %554
        %v556 = vsel %vm282, %v555, %v551
        %v559 = vsel %vm282, %v551, %v555
        %560 = vrot.lane.b32.xlu0 %v501, 112
        %v561 = vpop.permute.xlu0 %560
        %562 = vrot.lane.b32.xlu0 %v502, 112
        %v563 = vpop.permute.xlu0 %562
        %v564 = vsel %vm291, %v561, %v563
        %v568 = vsel %vm291, %v563, %v561
        %v569 = vsel %vm229, %v564, %v559
        %v570 = vsel %vm230, %v568, %v556
        %v571 = vsel %vm231, %v559, %v564
        %v572 = vsel %vm232, %v556, %v568
        %v575 = vrot.slane %v545, 4
        %v576 = vrot.slane %v546, 4
        %v579 = vrot.slane %v499, 4
        %v580 = vrot.slane %v500, 4
        %v583 = vrot.slane %v501, 4
        %v584 = vrot.slane %v502, 4
        %v589 = vrot.slane %v547, 4
        %v590 = vrot.slane %v548, 4
        %v593 = vsel %vm386, %v523, %v575
        %v594 = vsel %vm386, %v524, %v576
        %v595 = vsel %vm386, %v569, %v579
        %v596 = vsel %vm386, %v570, %v580
        %v597 = vsel %vm386, %v477, %v583
        %v598 = vsel %vm386, %v478, %v584
        %v599 = vsel %vm386, %v525, %v589
        %v600 = vsel %vm386, %v526, %v590
        %v602 = vsel %vm395, %v234, 0
        %v605 = vsel %vm386, %v571, 0
        %v608 = vsel %vm386, %v572, 0
        %610 = vmatpush.msra.mxu0 0.0
        %611 = vmatpush.msra.mxu0 0.0
        %612 = vmatpush.msra.mxu0 0.0
        %613 = vmatpush.msra.mxu0 0.0
        %614 = vmatpush.msra.mxu0 0.0
        %615 = vmatpush.msra.mxu0 0.0
        %616 = vmatpush.msra.mxu0 0.0
        %617 = vmatpush.msra.mxu0 0.0
        %618 = vmatpush.msra.mxu0 0.0
        %619 = vmatpush.msra.mxu0 0.0
        %620 = vmatpush.msra.mxu0 0.0
        %621 = vmatpush.msra.mxu0 %v605
        %622 = vmatpush.msra.mxu0 %v599
        %623 = vmatpush.msra.mxu0 %v597
        %624 = vmatpush.msra.mxu0 %v595
        %625 = vmatpush.msra.mxu0 %v593
        %626 = vmatmul.f32.gmra.mxu0 %v602
        %v627 = vpop.f32.mrf.mxu0
        %v628 = vadd.f32 0.0, %v627
        %629 = vdwg.mxu0
        %630 = vmatpush.msra.mxu0 0.0
        %631 = vmatpush.msra.mxu0 0.0
        %632 = vmatpush.msra.mxu0 0.0
        %633 = vmatpush.msra.mxu0 0.0
        %634 = vmatpush.msra.mxu0 0.0
        %635 = vmatpush.msra.mxu0 0.0
        %636 = vmatpush.msra.mxu0 0.0
        %637 = vmatpush.msra.mxu0 0.0
        %638 = vmatpush.msra.mxu0 0.0
        %639 = vmatpush.msra.mxu0 0.0
        %640 = vmatpush.msra.mxu0 0.0
        %641 = vmatpush.msra.mxu0 %v608
        %642 = vmatpush.msra.mxu0 %v600
        %643 = vmatpush.msra.mxu0 %v598
        %644 = vmatpush.msra.mxu0 %v596
        %645 = vmatpush.msra.mxu0 %v594
        %646 = vmatmul.f32.gmra.mxu0 %v602
        %v647 = vpop.f32.mrf.mxu0
        %v648 = vadd.f32 0.0, %v647
        %649 = vdwg.mxu0
        %v650 = vsel %vm386, %v628, 0.0
        %v651 = vsel %vm386, %v648, 0.0
        %v652 = vadd.f32 %v650, %v651
        %653 = vadd.xlane.f32.xlu0 %v652
        %v654 = vpop.xlane.xlu0 %653
        %v655 = vmul.f32 %v628, %v628
        %v656 = vmul.f32 %v648, %v648
        %v657 = vsel %vm386, %v655, 0.0
        %v658 = vsel %vm386, %v656, 0.0
        %v659 = vadd.f32 %v657, %v658
        %660 = vadd.xlane.f32.xlu0 %v659
        %v661 = vpop.xlane.xlu0 %660
        %v662 = vmul.f32 %v654, 0.00390625
        %v663 = vmul.f32 %v661, 0.00390625
        %v664 = vmul.f32 %v662, %v662
        %v665 = vsub.f32 %v663, %v664
        %v666 = vmax.f32 %v665, 0.0
        %v667 = vsub.f32 %v628, %v662
        %v668 = vsub.f32 %v648, %v662
        %v669 = vadd.f32 %v666, 1e-05
        %v670 = vrsqrt.pop %v669
        %v671 = vmul.f32 %v670, %v669
        %v672 = vmul.f32 %v671, %v670
        %v673 = vmul.f32 0.5, %v672
        %v674 = vsub.f32 1.5, %v673
        %v675 = vmul.f32 %v670, %v674
        %vm676 = vweird.f32 %v669
        %vm677 = vweird.f32 %v670
        %vm678 = vmor %vm676, %vm677
        %v679 = vsel %vm678, %v670, %v675
        %v680 = vmul.f32 %v667, %v679
        %v681 = vmul.f32 %v668, %v679
        %v684 = vrot.slane %v681, 4
        %v685 = vsel %vm386, %v680, %v684
        %v687 = vadd.f32 %v235, %v685
        %688 = vst [vmem:[%s217] sm:$0xff] %v687
        %s689 = sand.u32 %s97, 1
        %s690 = scalar_lea.sflag [#allocation4], %s689
        %s691 = sand.u32 %s97, 1
        %s692 = smul.addr %s691, 8
        %s693 = scalar_lea.vmem [#allocation8], %s692
        // Predicated region
        $region45: #{tpu_custom_call.1} parent=31 // pred_check
          %p694 = pneg %p107
        $region46: #{tpu_custom_call.1} parent=31 // pred_check_branch
          %696 = sbr.rel (%p694) target = $region48
        $region47: #{tpu_custom_call.1} parent=31 // pred_region
          %698 = vsyncadd %s690, 0
          %s699 = smul.addr %s21, 2
          %s700 = smul.addr %s699, 4
          %s701 = scalar_lea.hbm %s3, %s700
          %s703 = sshll.u32 %s693, 4
          %s704 = int_to_ptr.vmem [resolvable:$true] %s703
          %s705 = sshll.u32 %s701, 4
          %s706 = int_to_ptr.hbm [resolvable:$true] %s705
          %708 = dma.vmem_to_hbm [thread:$0]  %s704, 128, %s706, %s690
        $region48: #{tpu_custom_call.1} parent=31 // pred_fallthru
          _
      $region32: #{tpu_custom_call.1} parent=5 // pred_fallthru
        _
      %p709 = scmp.le.s32.totalorder 2, %s16
      // Predicated region
      $region49: #{tpu_custom_call.1} parent=5 // pred_check
        %p710 = pneg %p709
      $region50: #{tpu_custom_call.1} parent=5 // pred_check_branch
        %712 = sbr.rel (%p710) target = $region52
      $region51: #{tpu_custom_call.1} parent=5 // pred_region
        %s713 = ssub.s32 %s16, 2
        // Predicated region
        $region53: #{tpu_custom_call.1} parent=51 // pred_check
          %p714 = pneg %p113
        $region54: #{tpu_custom_call.1} parent=51 // pred_check_branch
          %716 = sbr.rel (%p714) target = $region56
        $region55: #{tpu_custom_call.1} parent=51 // pred_region
          %s717 = sand.u32 %s98, 1
          %s718 = scalar_lea.sflag [#allocation4], %s717
          %s719 = sand.u32 %s98, 1
          %s720 = smul.addr %s719, 8
          %s721 = scalar_lea.vmem [#allocation8], %s720
          %723 = dma.done %s718, 128
        $region56: #{tpu_custom_call.1} parent=51 // pred_fallthru
          _
      $region52: #{tpu_custom_call.1} parent=5 // pred_fallthru
        _
    $region6: #{tpu_custom_call.1} parent=1 // loop_footer
      %s20 = sadd.s32 1, %s16
    $region7: #{tpu_custom_call.1} parent=1 // loop_footer_branch
      %15 = sbr.rel target = $region3
    $region8: #{tpu_custom_call.1} parent=1 // loop_exit
      _
    %724 = vsyncpa [#allocation3], 1
    %s725 = scalar_lea.sflag [#allocation3], 1
    %726 = vsyncpa %s725, 1
    %727 = vsyncpa [#allocation6], 1
    %728 = vsyncpa [#allocation4], 1
    %s729 = scalar_lea.sflag [#allocation4], 1
    %730 = vsyncpa %s729, 1

</llo_original>
